<compile_context>
chip_gen: v6e
topology: v6e:2x2x1
jax: 0.10.0
libtpu: 0.0.40
codegen_flags: <defaults>
</compile_context>

<pallas_src>
import jax
import jax.numpy as jnp
import numpy as np
from jax.experimental import pallas as pl
from jax.experimental.pallas import tpu as pltpu


def _prelu(y, a):
    # PyTorch PReLU (single shared parameter): y if y >= 0 else a * y
    return jnp.where(y >= 0, y, a * y)


# --------------------------------------------------------------------------- #
# Kernel: operates on a lane-dense [rows, M*C] slab; rows = (batch, time).
# --------------------------------------------------------------------------- #
def tac_kernel(x_ref, w1_ref, b1_ref, w2_ref, b2_ref,
               w3a_ref, w3b_ref, b3_ref, alpha_ref, o_ref):
    x = x_ref[...]                       # [tR, MC] f32 (kept f32 for residual)
    mm_dtype = w1_ref.dtype              # bf16 (or f32) matmul-input dtype
    xm = x.astype(mm_dtype)

    a1 = alpha_ref[0]                    # PReLU slopes from SMEM (scalar path)
    a2 = alpha_ref[1]
    a3 = alpha_ref[2]

    # lin1: per-mic Linear(C->C) as one block-diagonal [MC, MC] matmul + PReLU.
    h0 = _prelu(
        jnp.dot(xm, w1_ref[...], preferred_element_type=jnp.float32)
        + b1_ref[...], a1)                                       # [tR, MC] f32
    h0m = h0.astype(mm_dtype)

    # lin2: mean over mics fused into the stacked weight tile(W2^T / M) [MC, C].
    h1 = _prelu(
        jnp.dot(h0m, w2_ref[...], preferred_element_type=jnp.float32)
        + b2_ref[...], a2)                                       # [tR, C]  f32

    # lin3: concat(h0, h1) @ W3^T == h0 @ blockdiag(W3a^T) + h1 @ lane_tile(W3b^T)
    z = _prelu(
        jnp.dot(h0m, w3a_ref[...], preferred_element_type=jnp.float32)
        + jnp.dot(h1.astype(mm_dtype), w3b_ref[...],
                  preferred_element_type=jnp.float32)
        + b3_ref[...], a3)                                       # [tR, MC] f32

    o_ref[...] = (x + z).astype(o_ref.dtype)


# --------------------------------------------------------------------------- #
# Parameter folding: build lane-dense / TAC-structure-folded weights.
# --------------------------------------------------------------------------- #
def _fold_tac_params(params, n_mic, input_dim, matmul_dtype):
    w1, b1, a1, w2, b2, a2, w3, b3, a3 = params
    M, C = n_mic, input_dim
    MC = M * C
    eye_m = jnp.eye(M, dtype=jnp.float32)
    # PyTorch Linear: y = x @ W.T + b  -> pre-transpose once in the wrapper.
    w1t, w2t, w3t = w1.T, w2.T, w3.T
    w1_bd = jnp.kron(eye_m, w1t).astype(matmul_dtype)           # [MC, MC] block-diag
    w2_st = (jnp.tile(w2t, (M, 1)) / M).astype(matmul_dtype)    # [MC, C]  fused mean
    w3a_bd = jnp.kron(eye_m, w3t[:C, :]).astype(matmul_dtype)   # [MC, MC] acts on h0
    w3b_tl = jnp.tile(w3t[C:, :], (1, M)).astype(matmul_dtype)  # [C, MC]  h1 -> all mics
    b1t = jnp.tile(b1, M).reshape(1, MC).astype(jnp.float32)
    b2r = b2.reshape(1, C).astype(jnp.float32)
    b3t = jnp.tile(b3, M).reshape(1, MC).astype(jnp.float32)
    alphas = jnp.stack([a1, a2, a3]).astype(jnp.float32)        # -> SMEM
    return w1_bd, b1t, w2_st, b2r, w3a_bd, w3b_tl, b3t, alphas


def _pick_row_tile(n_rows, lane_width,
                   vmem_budget_bytes=8 * 1024 * 1024, max_tile=1024):
    # Rough live-VMEM per row: double-buffered f32 in/out blocks + f32 h0/z
    # temporaries + their bf16 casts  ~= 10 row-copies of 4 bytes.
    per_row_bytes = lane_width * 4 * 10
    cap = min(max_tile, max(8, vmem_budget_bytes // per_row_bytes))
    cap = max(8, (cap // 8) * 8)          # sublane-aligned tile
    return n_rows if n_rows <= cap else cap


# --------------------------------------------------------------------------- #
# Public wrapper: accepts / returns the PyTorch [(B*M), T, C] layout.
# --------------------------------------------------------------------------- #
def tac_forward(x, params, n_mic, *, matmul_dtype=jnp.bfloat16):
    """x: [(B*M), T, C] float32 -> [(B*M), T, C] float32."""
    BM, T, C = x.shape
    M = n_mic
    assert BM % M == 0, "leading dim (B*M) must be divisible by n_mic"
    B = BM // M
    MC = M * C

    # Layout plumbing (outside the kernel): [(B*M),T,C] -> lane-dense [B*T, M*C].
    x2d = x.reshape(B, M, T, C).transpose(0, 2, 1, 3).reshape(B * T, MC)

    (w1_bd, b1t, w2_st, b2r,
     w3a_bd, w3b_tl, b3t, alphas) = _fold_tac_params(params, M, C, matmul_dtype)

    # Row tiling: biggest block that fits a conservative VMEM budget; pad rows
    # so the tile divides the (padded) extent, slice the padding off afterwards.
    rows = B * T
    tR = _pick_row_tile(rows, MC)
    padded_rows = ((rows + tR - 1) // tR) * tR
    if padded_rows != rows:
        x2d = jnp.pad(x2d, ((0, padded_rows - rows), (0, 0)))
    grid = (padded_rows // tR,)

    def full_spec(shape):
        return pl.BlockSpec(shape, lambda r, _n=len(shape): (0,) * _n)

    out2d = pl.pallas_call(
        tac_kernel,
        out_shape=jax.ShapeDtypeStruct((padded_rows, MC), x.dtype),
        grid_spec=pltpu.PrefetchScalarGridSpec(
            num_scalar_prefetch=0,
            grid=grid,
            in_specs=[
                pl.BlockSpec((tR, MC), lambda r: (r, 0)),        # x rows
                full_spec((MC, MC)), full_spec((1, MC)),         # lin1 (block-diag)
                full_spec((MC, C)), full_spec((1, C)),           # lin2 (mean fused)
                full_spec((MC, MC)), full_spec((C, MC)),
                full_spec((1, MC)),                              # lin3
                pl.BlockSpec(memory_space=pltpu.MemorySpace.SMEM),  # PReLU slopes
            ],
            out_specs=pl.BlockSpec((tR, MC), lambda r: (r, 0)),
        ),
        compiler_params=pltpu.CompilerParams(
            dimension_semantics=("parallel",),
            vmem_limit_bytes=32 * 1024 * 1024),
    )(x2d, w1_bd, b1t, w2_st, b2r, w3a_bd, w3b_tl, b3t, alphas)

    out2d = out2d[:rows]
    return out2d.reshape(B, T, M, C).transpose(0, 2, 1, 3).reshape(BM, T, C)


# --------------------------------------------------------------------------- #
# References (pure JAX) for testing.
# --------------------------------------------------------------------------- #
def tac_reference(x, params, n_mic):
    """Faithful f32 replica of the PyTorch forward."""
    w1, b1, a1, w2, b2, a2, w3, b3, a3 = params
    BM, T, C = x.shape
    B = BM // n_mic
    xr = x.reshape(B, n_mic, T, C)
    h0 = _prelu(xr @ w1.T + b1, a1)                                  # [B, M, T, C]
    h1 = _prelu(jnp.mean(h0, axis=1) @ w2.T + b2, a2)                # [B, T, C]
    h1b = jnp.broadcast_to(h1[:, None, :, :], h0.shape)              # [B, M, T, C]
    z = _prelu(jnp.concatenate([h0, h1b], axis=-1) @ w3.T + b3, a3)  # [B, M, T, C]
    return (xr + z).reshape(BM, T, C)


def tac_folded_reference(x, params, n_mic, matmul_dtype=jnp.bfloat16):
    """Pure-JAX mirror of the kernel's folded-weight / mixed-precision math."""
    BM, T, C = x.shape
    M = n_mic
    B = BM // M
    MC = M * C
    x2d = x.reshape(B, M, T, C).transpose(0, 2, 1, 3).reshape(B * T, MC)
    (w1_bd, b1t, w2_st, b2r,
     w3a_bd, w3b_tl, b3t, alphas) = _fold_tac_params(params, M, C, matmul_dtype)
    a1, a2, a3 = alphas[0], alphas[1], alphas[2]
    mm = lambda a, b: jnp.dot(a.astype(matmul_dtype), b,
                              preferred_element_type=jnp.float32)
    h0 = _prelu(mm(x2d, w1_bd) + b1t, a1)
    h1 = _prelu(mm(h0, w2_st) + b2r, a2)
    z = _prelu(mm(h0, w3a_bd) + mm(h1, w3b_tl) + b3t, a3)
    out2d = x2d + z
    return out2d.reshape(B, T, M, C).transpose(0, 2, 1, 3).reshape(BM, T, C)


def init_params(key, input_dim):
    C = input_dim
    ks = jax.random.split(key, 6)
    scale = 1.0 / np.sqrt(C)
    w1 = jax.random.uniform(ks[0], (C, C), jnp.float32, -scale, scale)
    b1 = jax.random.uniform(ks[1], (C,), jnp.float32, -scale, scale)
    w2 = jax.random.uniform(ks[2], (C, C), jnp.float32, -scale, scale)
    b2 = jax.random.uniform(ks[3], (C,), jnp.float32, -scale, scale)
    scale3 = 1.0 / np.sqrt(2 * C)
    w3 = jax.random.uniform(ks[4], (C, 2 * C), jnp.float32, -scale3, scale3)
    b3 = jax.random.uniform(ks[5], (C,), jnp.float32, -scale3, scale3)
    # PReLU default init = 0.25 (single shared parameter)
    a1 = jnp.array(0.25, jnp.float32)
    a2 = jnp.array(0.25, jnp.float32)
    a3 = jnp.array(0.25, jnp.float32)
    return (w1, b1, a1, w2, b2, a2, w3, b3, a3)


if __name__ == "__main__":
    n_mic = 4
    input_dim = 32
    B, T = 2, 8

    key = jax.random.PRNGKey(0)
    k_x, k_p = jax.random.split(key)
    x = jax.random.normal(k_x, (B * n_mic, T, input_dim), jnp.float32)
    params = init_params(k_p, input_dim)

    out = tac_forward(x, params, n_mic)          # default: bf16 MXU inputs
    out = jax.block_until_ready(out)
    assert out.shape == (B * n_mic, T, input_dim)

    # Tight consistency check against a pure-JAX mirror of the kernel math
    # (same folded weights, same bf16 matmul inputs, f32 accumulation).
    ref_folded = tac_folded_reference(x, params, n_mic)
    np.testing.assert_allclose(np.asarray(out), np.asarray(ref_folded),
                               rtol=1e-3, atol=1e-3)

    # Semantic check against the faithful f32 module reference (tolerance sized
    # for the bf16 matmul inputs used on the MXU path).
    ref_f32 = tac_reference(x, params, n_mic)
    np.testing.assert_allclose(np.asarray(out), np.asarray(ref_f32),
                               rtol=5e-2, atol=5e-2)

    print("KERNEL_OK")
</pallas_src>

<mosaic_0001>
module attributes {stable_mosaic.version = 11 : i64} {
  func.func @tac_kernel(%arg0: i32, %arg1: memref<16x128xf32, #tpu.memory_space<vmem>>, %arg2: memref<128x128xbf16, #tpu.memory_space<vmem>>, %arg3: memref<1x128xf32, #tpu.memory_space<vmem>>, %arg4: memref<128x32xbf16, #tpu.memory_space<vmem>>, %arg5: memref<1x32xf32, #tpu.memory_space<vmem>>, %arg6: memref<128x128xbf16, #tpu.memory_space<vmem>>, %arg7: memref<32x128xbf16, #tpu.memory_space<vmem>>, %arg8: memref<1x128xf32, #tpu.memory_space<vmem>>, %arg9: memref<3xf32, #tpu.memory_space<smem>>, %arg10: memref<16x128xf32, #tpu.memory_space<vmem>>) attributes {dimension_semantics = [#tpu.dimension_semantics<parallel>], iteration_bounds = array<i64: 1>, scalar_prefetch = 0 : i64, scratch_operands = 0 : i64, tpu.core_type = #tpu.core_type<tc>, window_params = [{transform_indices = @transform_0, window_bounds = array<i64: 16, 128>}, {pipeline_mode = #tpu.pipeline_mode<synchronous>, transform_indices = @transform_1, window_bounds = array<i64: 128, 128>}, {pipeline_mode = #tpu.pipeline_mode<synchronous>, transform_indices = @transform_2, window_bounds = array<i64: 1, 128>}, {pipeline_mode = #tpu.pipeline_mode<synchronous>, transform_indices = @transform_3, window_bounds = array<i64: 128, 32>}, {pipeline_mode = #tpu.pipeline_mode<synchronous>, transform_indices = @transform_4, window_bounds = array<i64: 1, 32>}, {pipeline_mode = #tpu.pipeline_mode<synchronous>, transform_indices = @transform_5, window_bounds = array<i64: 128, 128>}, {pipeline_mode = #tpu.pipeline_mode<synchronous>, transform_indices = @transform_6, window_bounds = array<i64: 32, 128>}, {pipeline_mode = #tpu.pipeline_mode<synchronous>, transform_indices = @transform_7, window_bounds = array<i64: 1, 128>}, {transform_indices = @transform_8, window_bounds = array<i64: 3>}, {transform_indices = @transform_9, window_bounds = array<i64: 16, 128>}]} {
    %c0 = arith.constant 0 : index
    %c0_0 = arith.constant 0 : index
    %0 = vector.load %arg1[%c0, %c0_0] : memref<16x128xf32, #tpu.memory_space<vmem>>, vector<16x128xf32>
    %1 = arith.truncf %0 : vector<16x128xf32> to vector<16x128xbf16>
    %c0_1 = arith.constant 0 : index
    %2 = memref.load %arg9[%c0_1] : memref<3xf32, #tpu.memory_space<smem>>
    %c1 = arith.constant 1 : index
    %3 = memref.load %arg9[%c1] : memref<3xf32, #tpu.memory_space<smem>>
    %c2 = arith.constant 2 : index
    %4 = memref.load %arg9[%c2] : memref<3xf32, #tpu.memory_space<smem>>
    %c0_2 = arith.constant 0 : index
    %c0_3 = arith.constant 0 : index
    %5 = vector.load %arg2[%c0_2, %c0_3] : memref<128x128xbf16, #tpu.memory_space<vmem>>, vector<128x128xbf16>
    %cst = arith.constant dense<0.000000e+00> : vector<16x128xf32>
    %6 = tpu.matmul %1, %5, %cst {dimension_numbers = #tpu.dot_dimension_numbers<[1], [0], [0], [1], [0, 0, 1, 1], [], []>} : vector<16x128xbf16>, vector<128x128xbf16>, vector<16x128xf32> -> vector<16x128xf32>
    %c0_4 = arith.constant 0 : index
    %c0_5 = arith.constant 0 : index
    %7 = vector.load %arg3[%c0_4, %c0_5] : memref<1x128xf32, #tpu.memory_space<vmem>>, vector<1x128xf32>
    %8 = vector.broadcast %7 : vector<1x128xf32> to vector<16x128xf32>
    %9 = arith.addf %6, %8 : vector<16x128xf32>
    %cst_6 = arith.constant 0.000000e+00 : f32
    %10 = vector.broadcast %cst_6 : f32 to vector<16x128xf32>
    %11 = arith.cmpf oge, %9, %10 : vector<16x128xf32>
    %12 = vector.broadcast %2 : f32 to vector<16x128xf32>
    %13 = arith.mulf %12, %9 : vector<16x128xf32>
    %14 = arith.select %11, %9, %13 : vector<16x128xi1>, vector<16x128xf32>
    %15 = arith.truncf %14 : vector<16x128xf32> to vector<16x128xbf16>
    %c0_7 = arith.constant 0 : index
    %c0_8 = arith.constant 0 : index
    %16 = vector.load %arg4[%c0_7, %c0_8] : memref<128x32xbf16, #tpu.memory_space<vmem>>, vector<128x32xbf16>
    %cst_9 = arith.constant dense<0.000000e+00> : vector<16x32xf32>
    %17 = tpu.matmul %15, %16, %cst_9 {dimension_numbers = #tpu.dot_dimension_numbers<[1], [0], [0], [1], [0, 0, 1, 1], [], []>} : vector<16x128xbf16>, vector<128x32xbf16>, vector<16x32xf32> -> vector<16x32xf32>
    %c0_10 = arith.constant 0 : index
    %c0_11 = arith.constant 0 : index
    %18 = vector.load %arg5[%c0_10, %c0_11] : memref<1x32xf32, #tpu.memory_space<vmem>>, vector<1x32xf32>
    %19 = vector.broadcast %18 : vector<1x32xf32> to vector<16x32xf32>
    %20 = arith.addf %17, %19 : vector<16x32xf32>
    %cst_12 = arith.constant 0.000000e+00 : f32
    %21 = vector.broadcast %cst_12 : f32 to vector<16x32xf32>
    %22 = arith.cmpf oge, %20, %21 : vector<16x32xf32>
    %23 = vector.broadcast %3 : f32 to vector<16x32xf32>
    %24 = arith.mulf %23, %20 : vector<16x32xf32>
    %25 = arith.select %22, %20, %24 : vector<16x32xi1>, vector<16x32xf32>
    %c0_13 = arith.constant 0 : index
    %c0_14 = arith.constant 0 : index
    %26 = vector.load %arg6[%c0_13, %c0_14] : memref<128x128xbf16, #tpu.memory_space<vmem>>, vector<128x128xbf16>
    %cst_15 = arith.constant dense<0.000000e+00> : vector<16x128xf32>
    %27 = tpu.matmul %15, %26, %cst_15 {dimension_numbers = #tpu.dot_dimension_numbers<[1], [0], [0], [1], [0, 0, 1, 1], [], []>} : vector<16x128xbf16>, vector<128x128xbf16>, vector<16x128xf32> -> vector<16x128xf32>
    %28 = arith.truncf %25 : vector<16x32xf32> to vector<16x32xbf16>
    %c0_16 = arith.constant 0 : index
    %c0_17 = arith.constant 0 : index
    %29 = vector.load %arg7[%c0_16, %c0_17] : memref<32x128xbf16, #tpu.memory_space<vmem>>, vector<32x128xbf16>
    %cst_18 = arith.constant dense<0.000000e+00> : vector<16x128xf32>
    %30 = tpu.matmul %28, %29, %cst_18 {dimension_numbers = #tpu.dot_dimension_numbers<[1], [0], [0], [1], [0, 0, 1, 1], [], []>} : vector<16x32xbf16>, vector<32x128xbf16>, vector<16x128xf32> -> vector<16x128xf32>
    %31 = arith.addf %27, %30 : vector<16x128xf32>
    %c0_19 = arith.constant 0 : index
    %c0_20 = arith.constant 0 : index
    %32 = vector.load %arg8[%c0_19, %c0_20] : memref<1x128xf32, #tpu.memory_space<vmem>>, vector<1x128xf32>
    %33 = vector.broadcast %32 : vector<1x128xf32> to vector<16x128xf32>
    %34 = arith.addf %31, %33 : vector<16x128xf32>
    %cst_21 = arith.constant 0.000000e+00 : f32
    %35 = vector.broadcast %cst_21 : f32 to vector<16x128xf32>
    %36 = arith.cmpf oge, %34, %35 : vector<16x128xf32>
    %37 = vector.broadcast %4 : f32 to vector<16x128xf32>
    %38 = arith.mulf %37, %34 : vector<16x128xf32>
    %39 = arith.select %36, %34, %38 : vector<16x128xi1>, vector<16x128xf32>
    %40 = arith.addf %0, %39 : vector<16x128xf32>
    %c0_22 = arith.constant 0 : index
    %c0_23 = arith.constant 0 : index
    %41 = vector.load %arg10[%c0_22, %c0_23] : memref<16x128xf32, #tpu.memory_space<vmem>>, vector<16x128xf32>
    tpu.vector_store %arg10[%c0_22, %c0_23], %40 {strides = array<i32>} : memref<16x128xf32, #tpu.memory_space<vmem>>, vector<16x128xf32>,
    return
  }
  func.func @transform_0(%arg0: i32) -> (i32, i32) {
    %c0_i32 = arith.constant 0 : i32
    %c0_i32_0 = arith.constant 0 : i32
    return %arg0, %c0_i32 : i32, i32
  }
  func.func @transform_1(%arg0: i32) -> (i32, i32) {
    %c0_i32 = arith.constant 0 : i32
    %c0_i32_0 = arith.constant 0 : i32
    %c0_i32_1 = arith.constant 0 : i32
    return %c0_i32, %c0_i32_0 : i32, i32
  }
  func.func @transform_2(%arg0: i32) -> (i32, i32) {
    %c0_i32 = arith.constant 0 : i32
    %c0_i32_0 = arith.constant 0 : i32
    %c0_i32_1 = arith.constant 0 : i32
    return %c0_i32, %c0_i32_0 : i32, i32
  }
  func.func @transform_3(%arg0: i32) -> (i32, i32) {
    %c0_i32 = arith.constant 0 : i32
    %c0_i32_0 = arith.constant 0 : i32
    %c0_i32_1 = arith.constant 0 : i32
    return %c0_i32, %c0_i32_0 : i32, i32
  }
  func.func @transform_4(%arg0: i32) -> (i32, i32) {
    %c0_i32 = arith.constant 0 : i32
    %c0_i32_0 = arith.constant 0 : i32
    %c0_i32_1 = arith.constant 0 : i32
    return %c0_i32, %c0_i32_0 : i32, i32
  }
  func.func @transform_5(%arg0: i32) -> (i32, i32) {
    %c0_i32 = arith.constant 0 : i32
    %c0_i32_0 = arith.constant 0 : i32
    %c0_i32_1 = arith.constant 0 : i32
    return %c0_i32, %c0_i32_0 : i32, i32
  }
  func.func @transform_6(%arg0: i32) -> (i32, i32) {
    %c0_i32 = arith.constant 0 : i32
    %c0_i32_0 = arith.constant 0 : i32
    %c0_i32_1 = arith.constant 0 : i32
    return %c0_i32, %c0_i32_0 : i32, i32
  }
  func.func @transform_7(%arg0: i32) -> (i32, i32) {
    %c0_i32 = arith.constant 0 : i32
    %c0_i32_0 = arith.constant 0 : i32
    %c0_i32_1 = arith.constant 0 : i32
    return %c0_i32, %c0_i32_0 : i32, i32
  }
  func.func @transform_8(%arg0: i32) -> i32 {
    %c0_i32 = arith.constant 0 : i32
    %c0_i32_0 = arith.constant 0 : i32
    return %c0_i32 : i32
  }
  func.func @transform_9(%arg0: i32) -> (i32, i32) {
    %c0_i32 = arith.constant 0 : i32
    %c0_i32_0 = arith.constant 0 : i32
    return %arg0, %c0_i32 : i32, i32
  }
}

</mosaic_0001>

<llo_original>
// kernel: tpu_custom_call.1
$region0: #{tpu_custom_call.1}
  #allocation0 [shape = 'u32[]', space=smem, size = 0x4, offset = 0x4, fixed_abs, tag = 'smem constant byte address 0x4 - core index']
  #allocation1 [shape = 'u32[144,128]{1,0:T(1,128)}', space=vmem, size = 0x12000, scoped, tag = 'internal scratch']
  %s0 = inlined_call_operand.vmem [shape: f32[16,128], index: 0, kind: input, shape index: {}]
  %s1 = inlined_call_operand.vmem [shape: bf16[128,128], index: 1, kind: input, shape index: {}]
  %s2 = inlined_call_operand.vmem [shape: f32[1,128], index: 2, kind: input, shape index: {}]
  %s3 = inlined_call_operand.vmem [shape: bf16[128,32], index: 3, kind: input, shape index: {}]
  %s4 = inlined_call_operand.vmem [shape: f32[1,32], index: 4, kind: input, shape index: {}]
  %s5 = inlined_call_operand.hbm [shape: bf16[128,128], index: 5, kind: input, shape index: {}]
  %s6 = inlined_call_operand.hbm [shape: bf16[32,128], index: 6, kind: input, shape index: {}]
  %s7 = inlined_call_operand.vmem [shape: f32[1,128], index: 7, kind: input, shape index: {}]
  %s8 = inlined_call_operand.vmem [shape: f32[3], index: 8, kind: input, shape index: {}]
  %s9 = inlined_call_operand.hbm [shape: f32[16,128], index: 9, kind: output, shape index: {}]
  %s10 = sld [smem:[#allocation0]]
  $region58: #{tpu_custom_call.1} parent=0
    _
  %s12 = ssub.s32 1, %s10
  %s13 = scalar_select 0, %s12, %s10
  $region1: #{tpu_custom_call.1} parent=0
    #allocation2 [shape = 'u8[32768]{0}', space=vmem, size = 0x8000, scoped, tag = 'input window, operand 5, single buffered']
    #allocation3 [shape = 's32[1]{0}', space=sflag, size = 0x4, scoped, tag = 'scoped memory for tpu_custom_call.1']
    #allocation4 [shape = 's32[1]{0}', space=sflag, size = 0x4, scoped, tag = 'scoped memory for tpu_custom_call.1']
    #allocation5 [shape = 's32[1]{0}', space=sflag, size = 0x4, scoped, tag = 'scoped memory for tpu_custom_call.1']
    #allocation6 [shape = 'u8[8192]{0}', space=vmem, size = 0x2000, scoped, tag = 'input window, operand 6, single buffered']
    #allocation7 [shape = 's32[1]{0}', space=sflag, size = 0x4, scoped, tag = 'scoped memory for tpu_custom_call.1']
    #allocation8 [shape = 'u8[512]{0}', space=smem, size = 0x200, scoped, tag = 'input window, operand 8, single buffered']
    #allocation9 [shape = 'u8[8192]{0}', space=vmem, size = 0x2000, scoped, tag = 'output window, operand 0, single buffered']
    %14 = vsyncpa [#allocation3], 0
    %15 = vsyncpa [#allocation7], 0
    %16 = vsyncpa [#allocation5], 0
    %17 = vsyncpa [#allocation4], 0
    // Predicated region
    $region2: #{tpu_custom_call.1} parent=1 // pred_check
      _
    $region3: #{tpu_custom_call.1} parent=1 // pred_check_branch
      %19 = sbr.rel (0) target = $region5
    $region4: #{tpu_custom_call.1} parent=1 // pred_region
      _
    $region5: #{tpu_custom_call.1} parent=1 // pred_fallthru
      _
    // Predicated region
    $region6: #{tpu_custom_call.1} parent=1 // pred_check
      _
    $region7: #{tpu_custom_call.1} parent=1 // pred_check_branch
      %21 = sbr.rel (0) target = $region9
    $region8: #{tpu_custom_call.1} parent=1 // pred_region
      _
    $region9: #{tpu_custom_call.1} parent=1 // pred_fallthru
      _
    // Predicated region
    $region10: #{tpu_custom_call.1} parent=1 // pred_check
      _
    $region11: #{tpu_custom_call.1} parent=1 // pred_check_branch
      %23 = sbr.rel (0) target = $region13
    $region12: #{tpu_custom_call.1} parent=1 // pred_region
      _
    $region13: #{tpu_custom_call.1} parent=1 // pred_fallthru
      _
    // Predicated region
    $region14: #{tpu_custom_call.1} parent=1 // pred_check
      _
    $region15: #{tpu_custom_call.1} parent=1 // pred_check_branch
      %25 = sbr.rel (0) target = $region17
    $region16: #{tpu_custom_call.1} parent=1 // pred_region
      _
    $region17: #{tpu_custom_call.1} parent=1 // pred_fallthru
      _
    // Predicated region
    $region18: #{tpu_custom_call.1} parent=1 // pred_check
      _
    $region19: #{tpu_custom_call.1} parent=1 // pred_check_branch
      %27 = sbr.rel (0) target = $region21
    $region20: #{tpu_custom_call.1} parent=1 // pred_region
      _
    $region21: #{tpu_custom_call.1} parent=1 // pred_fallthru
      _
    // Predicated region
    $region22: #{tpu_custom_call.1} parent=1 // pred_check
      _
    $region23: #{tpu_custom_call.1} parent=1 // pred_check_branch
      %29 = sbr.rel (0) target = $region25
    $region24: #{tpu_custom_call.1} parent=1 // pred_region
      %s31 = ssub.s32 1024, 1024
      %32 = vsyncadd [#allocation3], %s31
      %s33 = sshll.u32 [#allocation2], 4
      %s34 = int_to_ptr.vmem [resolvable:$true] %s33
      %39 = dma.hbm_to_vmem [thread:$0]  %s5, 1024, %s34, [#allocation3], 64, 64, 4
    $region25: #{tpu_custom_call.1} parent=1 // pred_fallthru
      _
    // Predicated region
    $region26: #{tpu_custom_call.1} parent=1 // pred_check
      _
    $region27: #{tpu_custom_call.1} parent=1 // pred_check_branch
      %41 = sbr.rel (0) target = $region29
    $region28: #{tpu_custom_call.1} parent=1 // pred_region
      %s43 = ssub.s32 256, 256
      %44 = vsyncadd [#allocation7], %s43
      %s45 = sshll.u32 [#allocation6], 4
      %s46 = int_to_ptr.vmem [resolvable:$true] %s45
      %51 = dma.hbm_to_vmem [thread:$0]  %s6, 256, %s46, [#allocation7], 64, 64, 4
    $region29: #{tpu_custom_call.1} parent=1 // pred_fallthru
      _
    // Predicated region
    $region30: #{tpu_custom_call.1} parent=1 // pred_check
      _
    $region31: #{tpu_custom_call.1} parent=1 // pred_check_branch
      %53 = sbr.rel (0) target = $region33
    $region32: #{tpu_custom_call.1} parent=1 // pred_region
      _
    $region33: #{tpu_custom_call.1} parent=1 // pred_fallthru
      _
    // Predicated region
    $region34: #{tpu_custom_call.1} parent=1 // pred_check
      _
    $region35: #{tpu_custom_call.1} parent=1 // pred_check_branch
      %55 = sbr.rel (0) target = $region37
    $region36: #{tpu_custom_call.1} parent=1 // pred_region
      %s57 = ssub.s32 16, 16
      %58 = vsyncadd [#allocation5], %s57
      %s60 = sshll.u32 %s8, 4
      %s61 = int_to_ptr.vmem [resolvable:$true] %s60
      %63 = dma.vmem_to_smem %s61, 16, [#allocation8], [#allocation5]
    $region37: #{tpu_custom_call.1} parent=1 // pred_fallthru
      _
    // Predicated region
    $region38: #{tpu_custom_call.1} parent=1 // pred_check
      _
    $region39: #{tpu_custom_call.1} parent=1 // pred_check_branch
      %65 = sbr.rel (0) target = $region41
    $region40: #{tpu_custom_call.1} parent=1 // pred_region
      %66 = dma.done [#allocation3], 1024
    $region41: #{tpu_custom_call.1} parent=1 // pred_fallthru
      _
    // Predicated region
    $region42: #{tpu_custom_call.1} parent=1 // pred_check
      _
    $region43: #{tpu_custom_call.1} parent=1 // pred_check_branch
      %68 = sbr.rel (0) target = $region45
    $region44: #{tpu_custom_call.1} parent=1 // pred_region
      %69 = dma.done [#allocation7], 256
    $region45: #{tpu_custom_call.1} parent=1 // pred_fallthru
      _
    // Predicated region
    $region46: #{tpu_custom_call.1} parent=1 // pred_check
      _
    $region47: #{tpu_custom_call.1} parent=1 // pred_check_branch
      %71 = sbr.rel (0) target = $region49
    $region48: #{tpu_custom_call.1} parent=1 // pred_region
      %72 = dma.done [#allocation5], 16
    $region49: #{tpu_custom_call.1} parent=1 // pred_fallthru
      _
    %73 = sfence
    %v75 = vld [vmem:[%s0] sm:$0xff]
    %v76 = vld [vmem:[%s0 + $0x8] sm:$0xff]
    %v77 = vpack.c.bf16 %v76, %v75
    %s78 = sld [smem:[#allocation8]]
    %s79 = sld [smem:[#allocation8 + $0x1]]
    %s80 = sld [smem:[#allocation8 + $0x2]]
    %v81 = vld [vmem:[%s1] sm:$0xf]
    %v82 = vld [vmem:[%s1 + $0x4] sm:$0xf]
    %v83 = vld [vmem:[%s1 + $0x8] sm:$0xf]
    %v84 = vld [vmem:[%s1 + $0xc] sm:$0xf]
    %v85 = vld [vmem:[%s1 + $0x10] sm:$0xf]
    %v86 = vld [vmem:[%s1 + $0x14] sm:$0xf]
    %v87 = vld [vmem:[%s1 + $0x18] sm:$0xf]
    %v88 = vld [vmem:[%s1 + $0x1c] sm:$0xf]
    %v89 = vld [vmem:[%s1 + $0x20] sm:$0xf]
    %v90 = vld [vmem:[%s1 + $0x24] sm:$0xf]
    %v91 = vld [vmem:[%s1 + $0x28] sm:$0xf]
    %v92 = vld [vmem:[%s1 + $0x2c] sm:$0xf]
    %v93 = vld [vmem:[%s1 + $0x30] sm:$0xf]
    %v94 = vld [vmem:[%s1 + $0x34] sm:$0xf]
    %v95 = vld [vmem:[%s1 + $0x38] sm:$0xf]
    %v96 = vld [vmem:[%s1 + $0x3c] sm:$0xf]
    %v97 = vld [vmem:[%s2] sm:$0x1]
    %v99 = vlaneseq
    %v100 = vshrl.u32 %v99, 7
    %v101 = vsub.s32 0, %v100
    %v102 = vrot.slane %v97, %v101
    %v120 = vunpack.c.l.b16 %v81
    %v121 = vunpack.c.l.b16 %v82
    %v122 = vunpack.c.l.b16 %v83
    %v123 = vunpack.c.l.b16 %v84
    %v124 = vunpack.c.l.b16 %v85
    %v125 = vunpack.c.l.b16 %v86
    %v126 = vunpack.c.l.b16 %v87
    %v127 = vunpack.c.l.b16 %v88
    %v128 = vunpack.c.l.b16 %v89
    %v129 = vunpack.c.l.b16 %v90
    %v130 = vunpack.c.l.b16 %v91
    %v131 = vunpack.c.l.b16 %v92
    %v132 = vunpack.c.l.b16 %v93
    %v133 = vunpack.c.l.b16 %v94
    %v134 = vunpack.c.l.b16 %v95
    %v135 = vunpack.c.l.b16 %v96
    %v136 = vpack.c.b16 %v121, %v120
    %v137 = vpack.c.b16 %v123, %v122
    %v138 = vpack.c.b16 %v125, %v124
    %v139 = vpack.c.b16 %v127, %v126
    %v140 = vpack.c.b16 %v129, %v128
    %v141 = vpack.c.b16 %v131, %v130
    %v142 = vpack.c.b16 %v133, %v132
    %v143 = vpack.c.b16 %v135, %v134
    %152 = vmatprep.subr.bf16.mxu0 0
    %153 = vmatpush1.bf16.msra.mxu0 %v143
    %154 = vmatprep.subr.bf16.mxu0 0
    %155 = vmatpush1.bf16.msra.mxu0 %v142
    %156 = vmatprep.subr.bf16.mxu0 0
    %157 = vmatpush1.bf16.msra.mxu0 %v141
    %158 = vmatprep.subr.bf16.mxu0 0
    %159 = vmatpush1.bf16.msra.mxu0 %v140
    %160 = vmatprep.subr.bf16.mxu0 0
    %161 = vmatpush1.bf16.msra.mxu0 %v139
    %162 = vmatprep.subr.bf16.mxu0 0
    %163 = vmatpush1.bf16.msra.mxu0 %v138
    %164 = vmatprep.subr.bf16.mxu0 0
    %165 = vmatpush1.bf16.msra.mxu0 %v137
    %166 = vmatprep.subr.bf16.mxu0 0
    %167 = vmatpush1.bf16.msra.mxu0 %v136
    %168 = vmatprep.subr.bf16.mxu0 0
    %169 = vmatpush2.bf16.msra.mxu0 0
    %170 = vmatprep.subr.bf16.mxu0 0
    %171 = vmatpush2.bf16.msra.mxu0 0
    %172 = vmatprep.subr.bf16.mxu0 0
    %173 = vmatpush2.bf16.msra.mxu0 0
    %174 = vmatprep.subr.bf16.mxu0 0
    %175 = vmatpush2.bf16.msra.mxu0 0
    %176 = vmatprep.subr.bf16.mxu0 0
    %177 = vmatpush2.bf16.msra.mxu0 0
    %178 = vmatprep.subr.bf16.mxu0 0
    %179 = vmatpush2.bf16.msra.mxu0 0
    %180 = vmatprep.subr.bf16.mxu0 0
    %181 = vmatpush2.bf16.msra.mxu0 0
    %182 = vmatprep.subr.bf16.mxu0 0
    %183 = vmatpush2.bf16.msra.mxu0 0
    %184 = vmatprep.mubr.bf16.mxu0 0
    %185 = vmatmul.mubr.bf16.gmra.mxu0 %v77
    %v186 = vpop.f32.mrf.mxu0
    %v187 = vadd.f32 %v102, %v186
    %v188 = vpop.f32.mrf.mxu0
    %v189 = vpop.f32.mrf.mxu0
    %v190 = vadd.f32 %v102, %v189
    %v191 = vpop.f32.mrf.mxu0
    %192 = vdwg.mxu0
    %vm193 = vcmp.ge.f32.partialorder %v187, 0.0
    %vm194 = vcmp.ge.f32.partialorder %v190, 0.0
    %v195 = vstv %s78
    %v196 = vmul.f32 %v195, %v187
    %v197 = vmul.f32 %v195, %v190
    %v198 = vsel %vm193, %v187, %v196
    %v199 = vsel %vm194, %v190, %v197
    %v200 = vpack.c.bf16 %v199, %v198
    %v201 = vld [vmem:[%s3] sm:$0xf]
    %v202 = vld [vmem:[%s3 + $0x4] sm:$0xf]
    %v203 = vld [vmem:[%s3 + $0x8] sm:$0xf]
    %v204 = vld [vmem:[%s3 + $0xc] sm:$0xf]
    %v205 = vld [vmem:[%s3 + $0x10] sm:$0xf]
    %v206 = vld [vmem:[%s3 + $0x14] sm:$0xf]
    %v207 = vld [vmem:[%s3 + $0x18] sm:$0xf]
    %v208 = vld [vmem:[%s3 + $0x1c] sm:$0xf]
    %v209 = vld [vmem:[%s3 + $0x20] sm:$0xf]
    %v210 = vld [vmem:[%s3 + $0x24] sm:$0xf]
    %v211 = vld [vmem:[%s3 + $0x28] sm:$0xf]
    %v212 = vld [vmem:[%s3 + $0x2c] sm:$0xf]
    %v213 = vld [vmem:[%s3 + $0x30] sm:$0xf]
    %v214 = vld [vmem:[%s3 + $0x34] sm:$0xf]
    %v215 = vld [vmem:[%s3 + $0x38] sm:$0xf]
    %v216 = vld [vmem:[%s3 + $0x3c] sm:$0xf]
    %v217 = vld [vmem:[%s4] sm:$0x1]
    %v219 = vlaneseq
    %v220 = vshrl.u32 %v219, 7
    %v221 = vsub.s32 0, %v220
    %v222 = vrot.slane %v217, %v221
    %v240 = vunpack.c.l.b16 %v201
    %v241 = vunpack.c.l.b16 %v202
    %v242 = vunpack.c.l.b16 %v203
    %v243 = vunpack.c.l.b16 %v204
    %v244 = vunpack.c.l.b16 %v205
    %v245 = vunpack.c.l.b16 %v206
    %v246 = vunpack.c.l.b16 %v207
    %v247 = vunpack.c.l.b16 %v208
    %v248 = vunpack.c.l.b16 %v209
    %v249 = vunpack.c.l.b16 %v210
    %v250 = vunpack.c.l.b16 %v211
    %v251 = vunpack.c.l.b16 %v212
    %v252 = vunpack.c.l.b16 %v213
    %v253 = vunpack.c.l.b16 %v214
    %v254 = vunpack.c.l.b16 %v215
    %v255 = vunpack.c.l.b16 %v216
    %v256 = vpack.c.b16 %v241, %v240
    %v257 = vpack.c.b16 %v243, %v242
    %v258 = vpack.c.b16 %v245, %v244
    %v259 = vpack.c.b16 %v247, %v246
    %v260 = vpack.c.b16 %v249, %v248
    %v261 = vpack.c.b16 %v251, %v250
    %v262 = vpack.c.b16 %v253, %v252
    %v263 = vpack.c.b16 %v255, %v254
    %272 = vmatprep.subr.bf16.mxu0 0
    %273 = vmatpush1.bf16.msra.mxu0 %v263
    %274 = vmatprep.subr.bf16.mxu0 0
    %275 = vmatpush1.bf16.msra.mxu0 %v262
    %276 = vmatprep.subr.bf16.mxu0 0
    %277 = vmatpush1.bf16.msra.mxu0 %v261
    %278 = vmatprep.subr.bf16.mxu0 0
    %279 = vmatpush1.bf16.msra.mxu0 %v260
    %280 = vmatprep.subr.bf16.mxu0 0
    %281 = vmatpush1.bf16.msra.mxu0 %v259
    %282 = vmatprep.subr.bf16.mxu0 0
    %283 = vmatpush1.bf16.msra.mxu0 %v258
    %284 = vmatprep.subr.bf16.mxu0 0
    %285 = vmatpush1.bf16.msra.mxu0 %v257
    %286 = vmatprep.subr.bf16.mxu0 0
    %287 = vmatpush1.bf16.msra.mxu0 %v256
    %288 = vmatprep.subr.bf16.mxu0 0
    %289 = vmatpush2.bf16.msra.mxu0 0
    %290 = vmatprep.subr.bf16.mxu0 0
    %291 = vmatpush2.bf16.msra.mxu0 0
    %292 = vmatprep.subr.bf16.mxu0 0
    %293 = vmatpush2.bf16.msra.mxu0 0
    %294 = vmatprep.subr.bf16.mxu0 0
    %295 = vmatpush2.bf16.msra.mxu0 0
    %296 = vmatprep.subr.bf16.mxu0 0
    %297 = vmatpush2.bf16.msra.mxu0 0
    %298 = vmatprep.subr.bf16.mxu0 0
    %299 = vmatpush2.bf16.msra.mxu0 0
    %300 = vmatprep.subr.bf16.mxu0 0
    %301 = vmatpush2.bf16.msra.mxu0 0
    %302 = vmatprep.subr.bf16.mxu0 0
    %303 = vmatpush2.bf16.msra.mxu0 0
    %304 = vmatprep.mubr.bf16.mxu0 0
    %305 = vmatmul.mubr.bf16.gmra.mxu0 %v200
    %v306 = vpop.f32.mrf.mxu0
    %v307 = vadd.f32 %v222, %v306
    %v308 = vpop.f32.mrf.mxu0
    %v309 = vpop.f32.mrf.mxu0
    %v310 = vadd.f32 %v222, %v309
    %v311 = vpop.f32.mrf.mxu0
    %312 = vdwg.mxu0
    %vm313 = vcmp.ge.f32.partialorder %v307, 0.0
    %vm314 = vcmp.ge.f32.partialorder %v310, 0.0
    %v315 = vstv %s79
    %v316 = vmul.f32 %v315, %v307
    %v317 = vmul.f32 %v315, %v310
    %v318 = vsel %vm313, %v307, %v316
    %v319 = vsel %vm314, %v310, %v317
    %v320 = vld [vmem:[#allocation2] sm:$0xf]
    %v321 = vld [vmem:[#allocation2 + $0x4] sm:$0xf]
    %v322 = vld [vmem:[#allocation2 + $0x8] sm:$0xf]
    %v323 = vld [vmem:[#allocation2 + $0xc] sm:$0xf]
    %v324 = vld [vmem:[#allocation2 + $0x10] sm:$0xf]
    %v325 = vld [vmem:[#allocation2 + $0x14] sm:$0xf]
    %v326 = vld [vmem:[#allocation2 + $0x18] sm:$0xf]
    %v327 = vld [vmem:[#allocation2 + $0x1c] sm:$0xf]
    %v328 = vld [vmem:[#allocation2 + $0x20] sm:$0xf]
    %v329 = vld [vmem:[#allocation2 + $0x24] sm:$0xf]
    %v330 = vld [vmem:[#allocation2 + $0x28] sm:$0xf]
    %v331 = vld [vmem:[#allocation2 + $0x2c] sm:$0xf]
    %v332 = vld [vmem:[#allocation2 + $0x30] sm:$0xf]
    %v333 = vld [vmem:[#allocation2 + $0x34] sm:$0xf]
    %v334 = vld [vmem:[#allocation2 + $0x38] sm:$0xf]
    %v335 = vld [vmem:[#allocation2 + $0x3c] sm:$0xf]
    %v336 = vpack.c.bf16 %v319, %v318
    %v337 = vld [vmem:[#allocation6] sm:$0xf]
    %v338 = vld [vmem:[#allocation6 + $0x4] sm:$0xf]
    %v339 = vld [vmem:[#allocation6 + $0x8] sm:$0xf]
    %v340 = vld [vmem:[#allocation6 + $0xc] sm:$0xf]
    %v345 = vunpack.c.l.b16 %v337
    %v346 = vunpack.c.l.b16 %v338
    %v347 = vunpack.c.l.b16 %v339
    %v348 = vunpack.c.l.b16 %v340
    %v349 = vpack.c.b16 %v346, %v345
    %v350 = vpack.c.b16 %v348, %v347
    %vm353 = vcmask 261120
    %v355 = vsel %vm353, %v336, 0
    %357 = vmatprep.subr.bf16.mxu0 0
    %358 = vmatpush1.bf16.msra.mxu0 0
    %359 = vmatprep.subr.bf16.mxu0 0
    %360 = vmatpush1.bf16.msra.mxu0 0
    %361 = vmatprep.subr.bf16.mxu0 0
    %362 = vmatpush1.bf16.msra.mxu0 0
    %363 = vmatprep.subr.bf16.mxu0 0
    %364 = vmatpush1.bf16.msra.mxu0 0
    %365 = vmatprep.subr.bf16.mxu0 0
    %366 = vmatpush1.bf16.msra.mxu0 0
    %367 = vmatprep.subr.bf16.mxu0 0
    %368 = vmatpush1.bf16.msra.mxu0 0
    %369 = vmatprep.subr.bf16.mxu0 0
    %370 = vmatpush1.bf16.msra.mxu0 %v350
    %371 = vmatprep.subr.bf16.mxu0 0
    %372 = vmatpush1.bf16.msra.mxu0 %v349
    %373 = vmatprep.subr.bf16.mxu0 0
    %374 = vmatpush2.bf16.msra.mxu0 0
    %375 = vmatprep.subr.bf16.mxu0 0
    %376 = vmatpush2.bf16.msra.mxu0 0
    %377 = vmatprep.subr.bf16.mxu0 0
    %378 = vmatpush2.bf16.msra.mxu0 0
    %379 = vmatprep.subr.bf16.mxu0 0
    %380 = vmatpush2.bf16.msra.mxu0 0
    %381 = vmatprep.subr.bf16.mxu0 0
    %382 = vmatpush2.bf16.msra.mxu0 0
    %383 = vmatprep.subr.bf16.mxu0 0
    %384 = vmatpush2.bf16.msra.mxu0 0
    %385 = vmatprep.subr.bf16.mxu0 0
    %386 = vmatpush2.bf16.msra.mxu0 0
    %387 = vmatprep.subr.bf16.mxu0 0
    %388 = vmatpush2.bf16.msra.mxu0 0
    %389 = vmatprep.mubr.bf16.mxu0 0
    %390 = vmatmul.mubr.bf16.gmra.mxu0 %v355
    %v391 = vpop.f32.mrf.mxu0
    %v392 = vadd.f32 0.0, %v391
    %v393 = vpop.f32.mrf.mxu0
    %v394 = vpop.f32.mrf.mxu0
    %v395 = vadd.f32 0.0, %v394
    %v396 = vpop.f32.mrf.mxu0
    %397 = vdwg.mxu0
    %v414 = vunpack.c.l.b16 %v320
    %v415 = vunpack.c.l.b16 %v321
    %v416 = vunpack.c.l.b16 %v322
    %v417 = vunpack.c.l.b16 %v323
    %v418 = vunpack.c.l.b16 %v324
    %v419 = vunpack.c.l.b16 %v325
    %v420 = vunpack.c.l.b16 %v326
    %v421 = vunpack.c.l.b16 %v327
    %v422 = vunpack.c.l.b16 %v328
    %v423 = vunpack.c.l.b16 %v329
    %v424 = vunpack.c.l.b16 %v330
    %v425 = vunpack.c.l.b16 %v331
    %v426 = vunpack.c.l.b16 %v332
    %v427 = vunpack.c.l.b16 %v333
    %v428 = vunpack.c.l.b16 %v334
    %v429 = vunpack.c.l.b16 %v335
    %v430 = vpack.c.b16 %v415, %v414
    %v431 = vpack.c.b16 %v417, %v416
    %v432 = vpack.c.b16 %v419, %v418
    %v433 = vpack.c.b16 %v421, %v420
    %v434 = vpack.c.b16 %v423, %v422
    %v435 = vpack.c.b16 %v425, %v424
    %v436 = vpack.c.b16 %v427, %v426
    %v437 = vpack.c.b16 %v429, %v428
    %446 = vmatprep.subr.bf16.mxu0 0
    %447 = vmatpush1.bf16.msra.mxu0 %v437
    %448 = vmatprep.subr.bf16.mxu0 0
    %449 = vmatpush1.bf16.msra.mxu0 %v436
    %450 = vmatprep.subr.bf16.mxu0 0
    %451 = vmatpush1.bf16.msra.mxu0 %v435
    %452 = vmatprep.subr.bf16.mxu0 0
    %453 = vmatpush1.bf16.msra.mxu0 %v434
    %454 = vmatprep.subr.bf16.mxu0 0
    %455 = vmatpush1.bf16.msra.mxu0 %v433
    %456 = vmatprep.subr.bf16.mxu0 0
    %457 = vmatpush1.bf16.msra.mxu0 %v432
    %458 = vmatprep.subr.bf16.mxu0 0
    %459 = vmatpush1.bf16.msra.mxu0 %v431
    %460 = vmatprep.subr.bf16.mxu0 0
    %461 = vmatpush1.bf16.msra.mxu0 %v430
    %462 = vmatprep.subr.bf16.mxu0 0
    %463 = vmatpush2.bf16.msra.mxu0 0
    %464 = vmatprep.subr.bf16.mxu0 0
    %465 = vmatpush2.bf16.msra.mxu0 0
    %466 = vmatprep.subr.bf16.mxu0 0
    %467 = vmatpush2.bf16.msra.mxu0 0
    %468 = vmatprep.subr.bf16.mxu0 0
    %469 = vmatpush2.bf16.msra.mxu0 0
    %470 = vmatprep.subr.bf16.mxu0 0
    %471 = vmatpush2.bf16.msra.mxu0 0
    %472 = vmatprep.subr.bf16.mxu0 0
    %473 = vmatpush2.bf16.msra.mxu0 0
    %474 = vmatprep.subr.bf16.mxu0 0
    %475 = vmatpush2.bf16.msra.mxu0 0
    %476 = vmatprep.subr.bf16.mxu0 0
    %477 = vmatpush2.bf16.msra.mxu0 0
    %478 = vmatprep.mubr.bf16.mxu0 0
    %479 = vmatmul.mubr.bf16.gmra.mxu0 %v200
    %v480 = vpop.f32.mrf.mxu0
    %v481 = vadd.f32 %v392, %v480
    %v482 = vpop.f32.mrf.mxu0
    %v483 = vpop.f32.mrf.mxu0
    %v484 = vadd.f32 %v395, %v483
    %v485 = vpop.f32.mrf.mxu0
    %486 = vdwg.mxu0
    %v487 = vld [vmem:[%s7] sm:$0x1]
    %v489 = vlaneseq
    %v490 = vshrl.u32 %v489, 7
    %v491 = vsub.s32 0, %v490
    %v492 = vrot.slane %v487, %v491
    %v494 = vadd.f32 %v481, %v492
    %v495 = vadd.f32 %v484, %v492
    %vm496 = vcmp.ge.f32.partialorder %v494, 0.0
    %vm497 = vcmp.ge.f32.partialorder %v495, 0.0
    %v498 = vstv %s80
    %v499 = vmul.f32 %v498, %v494
    %v500 = vmul.f32 %v498, %v495
    %v501 = vsel %vm496, %v494, %v499
    %v502 = vsel %vm497, %v495, %v500
    %v503 = vadd.f32 %v75, %v501
    %v504 = vadd.f32 %v76, %v502
    %505 = vst [vmem:[#allocation9] sm:$0xff] %v503
    %506 = vst [vmem:[#allocation9 + $0x8] sm:$0xff] %v504
    // Predicated region
    $region50: #{tpu_custom_call.1} parent=1 // pred_check
      _
    $region51: #{tpu_custom_call.1} parent=1 // pred_check_branch
      %508 = sbr.rel (0) target = $region53
    $region52: #{tpu_custom_call.1} parent=1 // pred_region
      %s510 = ssub.s32 256, 256
      %511 = vsyncadd [#allocation4], %s510
      %s512 = sshll.u32 [#allocation9], 4
      %s513 = int_to_ptr.vmem [resolvable:$true] %s512
      %518 = dma.vmem_to_hbm [thread:$0]  %s513, 256, %s9, [#allocation4], 128, 128, 8
    $region53: #{tpu_custom_call.1} parent=1 // pred_fallthru
      _
    // Predicated region
    $region54: #{tpu_custom_call.1} parent=1 // pred_check
      _
    $region55: #{tpu_custom_call.1} parent=1 // pred_check_branch
      %520 = sbr.rel (0) target = $region57
    $region56: #{tpu_custom_call.1} parent=1 // pred_region
      %521 = dma.done [#allocation4], 256
    $region57: #{tpu_custom_call.1} parent=1 // pred_fallthru
      _
    %522 = vsyncpa [#allocation3], 1
    %523 = vsyncpa [#allocation7], 1
    %524 = vsyncpa [#allocation4], 1
    %525 = vsyncpa [#allocation5], 1

</llo_original>
